<compile_context>
chip_gen: v6e
topology: v6e:2x2x1
jax: 0.10.0
libtpu: 0.0.40
codegen_flags: <defaults>
</compile_context>

<pallas_src>
import jax
import jax.numpy as jnp
from jax import lax
from jax.experimental import pallas as pl
from jax.experimental.pallas import tpu as pltpu


def mlp_kernel(x_ref, w1_ref, b1_ref, w2_ref, b2_ref, o_ref):
    """One batch tile.

      x_ref  : (TB, D)      batch tile of inputs (feature-minor, PyTorch layout)
      w1_ref : (H, D)       fc1 weight, PyTorch (out, in) layout, H sublane-aligned
      b1_ref : (H, 1)  f32  fc1 bias as a column
      w2_ref : (H, 1)  f32  fc2 weight as a column
      b2_ref : (1, 1)  SMEM fc2 bias (scalar)
      o_ref  : (1, TB) f32  sigmoid outputs, batch on the lane axis
    """
    # fc1 transposed: h = W1 @ x^T -> (H, TB); contract the feature dim of both
    # operands so batch lands on lanes.  f32 accumulation on the MXU.
    h = lax.dot_general(
        w1_ref[...], x_ref[...],
        dimension_numbers=(((1,), (1,)), ((), ())),
        preferred_element_type=jnp.float32,
    )
    h = jnp.maximum(h + b1_ref[...], 0.0)                  # bias + ReLU (VPU, f32)

    # fc2: N=1 matmul -> elementwise multiply (VPU) + sublane reduce (XLU).
    z = jnp.sum(h * w2_ref[...], axis=0, keepdims=True)    # (1, TB)
    z = z + b2_ref[0, 0]

    # Exact sigmoid: exp on the EUP, one divide; EUP slot has plenty of slack.
    o_ref[...] = (1.0 / (1.0 + jnp.exp(-z))).astype(o_ref.dtype)


def prepare_params(w1, b1, w2, b2, *, input_dtype=jnp.float32):
    """One-time prep of PyTorch-layout params into kernel layout.

    w1: (H, D), b1: (H,)   -- nn.Linear(D, H)
    w2: (1, H), b2: (1,)   -- nn.Linear(H, 1)
    input_dtype: dtype used for the matmul operands (x, W1); jnp.bfloat16 halves
    the dominant HBM stream on v6e/v7x.  Everything post-matmul stays f32.
    """
    hidden, d_in = w1.shape
    hp = 8 * pl.cdiv(hidden, 8)     # sublane alignment only (64 stays 64)
    w1p = jnp.zeros((hp, d_in), input_dtype).at[:hidden, :].set(w1.astype(input_dtype))
    b1p = jnp.zeros((hp, 1), jnp.float32).at[:hidden, 0].set(b1.astype(jnp.float32))
    w2p = jnp.zeros((hp, 1), jnp.float32).at[:hidden, 0].set(
        jnp.reshape(w2, (-1,)).astype(jnp.float32))
    b2p = jnp.asarray(b2, jnp.float32).reshape(1, 1)
    return w1p, b1p, w2p, b2p


def _choose_batch_tile(batch, block_batch):
    """Lane-aligned batch tile; >= 2 grid steps when the batch allows (v7x 2 TCs)."""
    bp128 = 128 * pl.cdiv(batch, 128)
    tb = 128 * pl.cdiv(min(block_batch, bp128), 128)
    if pl.cdiv(bp128, tb) < 2 and bp128 >= 256:
        tb = 128 * pl.cdiv(bp128 // 2, 128)
    return tb


def neural_network_forward(x, params, *, block_batch=1024):
    """Forward pass.  x: (B, D); params: output of prepare_params.  Returns (B, 1) f32."""
    w1p, b1p, w2p, b2p = params
    batch, d_in = x.shape
    hp = w1p.shape[0]

    tb = _choose_batch_tile(batch, block_batch)
    num_tiles = pl.cdiv(batch, tb)          # no wrapper jnp.pad: boundary tile is
                                            # handled by Pallas (OOB writes dropped)
    x_in = x.astype(w1p.dtype)              # no-op for the default f32 path

    out = pl.pallas_call(
        mlp_kernel,
        out_shape=jax.ShapeDtypeStruct((1, batch), jnp.float32),
        grid=(num_tiles,),
        in_specs=[
            pl.BlockSpec((tb, d_in), lambda i: (i, 0)),          # x: tiled on batch
            pl.BlockSpec((hp, d_in), lambda i: (0, 0)),          # W1: VMEM-resident
            pl.BlockSpec((hp, 1), lambda i: (0, 0)),             # b1: VMEM-resident
            pl.BlockSpec((hp, 1), lambda i: (0, 0)),             # W2: VMEM-resident
            pl.BlockSpec(memory_space=pltpu.MemorySpace.SMEM),   # b2: scalar in SMEM
        ],
        # Lane-dense output: batch on the lane axis -> one dense vst per tile.
        out_specs=pl.BlockSpec((1, tb), lambda i: (0, i)),
        compiler_params=pltpu.CompilerParams(
            dimension_semantics=("parallel",),   # independent batch tiles
        ),
    )(x_in, w1p, b1p, w2p, b2p)

    return out[0].reshape(batch, 1)


def init_params(key, input_size, hidden=64, out=1):
    """PyTorch nn.Linear-style init in PyTorch (out_features, in_features) layout."""
    k1, k2, k3, k4 = jax.random.split(key, 4)
    bound1 = 1.0 / jnp.sqrt(input_size)
    bound2 = 1.0 / jnp.sqrt(hidden)
    w1 = jax.random.uniform(k1, (hidden, input_size), jnp.float32, -bound1, bound1)
    b1 = jax.random.uniform(k2, (hidden,), jnp.float32, -bound1, bound1)
    w2 = jax.random.uniform(k3, (out, hidden), jnp.float32, -bound2, bound2)
    b2 = jax.random.uniform(k4, (out,), jnp.float32, -bound2, bound2)
    return w1, b1, w2, b2


if __name__ == "__main__":
    key = jax.random.PRNGKey(0)
    k_x, k_p = jax.random.split(key)

    batch = 200          # not a tile multiple: exercises the no-pad boundary tile
    input_size = 32      # stand-in for X_train.shape[1]

    x = jax.random.normal(k_x, (batch, input_size), jnp.float32)
    w1, b1, w2, b2 = init_params(k_p, input_size)

    # One-time parameter prep (hoisted out of the per-call path).
    params = prepare_params(w1, b1, w2, b2)            # f32 path, bit-faithful
    out = neural_network_forward(x, params, block_batch=1024)   # tile auto-caps to 128
    out = jax.block_until_ready(out)

    # Pure-JAX reference (PyTorch semantics: x @ W^T + b), exact f32 matmuls.
    hp = jnp.maximum(
        jnp.dot(x, w1.T, precision=lax.Precision.HIGHEST) + b1, 0.0)
    ref = jax.nn.sigmoid(
        jnp.dot(hp, w2.T, precision=lax.Precision.HIGHEST) + b2)

    assert out.shape == (batch, 1)
    assert jnp.max(jnp.abs(out - ref)) < 5e-4, "mismatch vs reference"

    print("KERNEL_OK")
</pallas_src>

<mosaic_0001>
module attributes {stable_mosaic.version = 11 : i64} {
  func.func @mlp_kernel(%arg0: i32, %arg1: memref<128x32xf32, #tpu.memory_space<vmem>>, %arg2: memref<64x32xf32, #tpu.memory_space<vmem>>, %arg3: memref<64x1xf32, #tpu.memory_space<vmem>>, %arg4: memref<64x1xf32, #tpu.memory_space<vmem>>, %arg5: memref<1x1xf32, #tpu.memory_space<smem>>, %arg6: memref<1x128xf32, #tpu.memory_space<vmem>>) attributes {dimension_semantics = [#tpu.dimension_semantics<parallel>], iteration_bounds = array<i64: 2>, scalar_prefetch = 0 : i64, scratch_operands = 0 : i64, tpu.core_type = #tpu.core_type<tc>, window_params = [{transform_indices = @transform_0, window_bounds = array<i64: 128, 32>}, {pipeline_mode = #tpu.pipeline_mode<synchronous>, transform_indices = @transform_1, window_bounds = array<i64: 64, 32>}, {pipeline_mode = #tpu.pipeline_mode<synchronous>, transform_indices = @transform_2, window_bounds = array<i64: 64, 1>}, {pipeline_mode = #tpu.pipeline_mode<synchronous>, transform_indices = @transform_3, window_bounds = array<i64: 64, 1>}, {transform_indices = @transform_4, window_bounds = array<i64: 1, 1>}, {transform_indices = @transform_5, window_bounds = array<i64: 1, 128>}]} {
    %c0 = arith.constant 0 : index
    %c0_0 = arith.constant 0 : index
    %0 = vector.load %arg2[%c0, %c0_0] : memref<64x32xf32, #tpu.memory_space<vmem>>, vector<64x32xf32>
    %c0_1 = arith.constant 0 : index
    %c0_2 = arith.constant 0 : index
    %1 = vector.load %arg1[%c0_1, %c0_2] : memref<128x32xf32, #tpu.memory_space<vmem>>, vector<128x32xf32>
    %cst = arith.constant dense<0.000000e+00> : vector<64x128xf32>
    %2 = tpu.matmul %0, %1, %cst {dimension_numbers = #tpu.dot_dimension_numbers<[1], [1], [0], [0], [0, 0, 1, 0], [], []>} : vector<64x32xf32>, vector<128x32xf32>, vector<64x128xf32> -> vector<64x128xf32>
    %c0_3 = arith.constant 0 : index
    %c0_4 = arith.constant 0 : index
    %3 = vector.load %arg3[%c0_3, %c0_4] : memref<64x1xf32, #tpu.memory_space<vmem>>, vector<64x1xf32>
    %4 = vector.broadcast %3 : vector<64x1xf32> to vector<64x128xf32>
    %5 = arith.addf %2, %4 : vector<64x128xf32>
    %cst_5 = arith.constant 0.000000e+00 : f32
    %6 = vector.broadcast %cst_5 : f32 to vector<64x128xf32>
    %7 = arith.maximumf %5, %6 : vector<64x128xf32>
    %c0_6 = arith.constant 0 : index
    %c0_7 = arith.constant 0 : index
    %8 = vector.load %arg4[%c0_6, %c0_7] : memref<64x1xf32, #tpu.memory_space<vmem>>, vector<64x1xf32>
    %9 = vector.broadcast %8 : vector<64x1xf32> to vector<64x128xf32>
    %10 = arith.mulf %7, %9 : vector<64x128xf32>
    %cst_8 = arith.constant dense<0.000000e+00> : vector<128xf32>
    %11 = vector.multi_reduction <add>, %10, %cst_8 [0] : vector<64x128xf32> to vector<128xf32>
    %12 = vector.shape_cast %11 : vector<128xf32> to vector<1x128xf32>
    %c0_9 = arith.constant 0 : index
    %c0_10 = arith.constant 0 : index
    %13 = memref.load %arg5[%c0_9, %c0_10] : memref<1x1xf32, #tpu.memory_space<smem>>
    %14 = vector.broadcast %13 : f32 to vector<1x128xf32>
    %15 = arith.addf %12, %14 : vector<1x128xf32>
    %cst_11 = arith.constant 0.000000e+00 : f32
    %16 = vector.broadcast %cst_11 : f32 to vector<1x128xf32>
    %17 = arith.subf %16, %15 : vector<1x128xf32>
    %18 = math.exp %17 : vector<1x128xf32>
    %cst_12 = arith.constant 1.000000e+00 : f32
    %19 = vector.broadcast %cst_12 : f32 to vector<1x128xf32>
    %20 = arith.addf %19, %18 : vector<1x128xf32>
    %cst_13 = arith.constant 1.000000e+00 : f32
    %21 = vector.broadcast %cst_13 : f32 to vector<1x128xf32>
    %22 = arith.divf %21, %20 : vector<1x128xf32>
    %c0_14 = arith.constant 0 : index
    %c0_15 = arith.constant 0 : index
    %23 = vector.load %arg6[%c0_14, %c0_15] : memref<1x128xf32, #tpu.memory_space<vmem>>, vector<1x128xf32>
    tpu.vector_store %arg6[%c0_14, %c0_15], %22 {strides = array<i32>} : memref<1x128xf32, #tpu.memory_space<vmem>>, vector<1x128xf32>,
    return
  }
  func.func @transform_0(%arg0: i32) -> (i32, i32) {
    %c0_i32 = arith.constant 0 : i32
    %c0_i32_0 = arith.constant 0 : i32
    return %arg0, %c0_i32 : i32, i32
  }
  func.func @transform_1(%arg0: i32) -> (i32, i32) {
    %c0_i32 = arith.constant 0 : i32
    %c0_i32_0 = arith.constant 0 : i32
    %c0_i32_1 = arith.constant 0 : i32
    return %c0_i32, %c0_i32_0 : i32, i32
  }
  func.func @transform_2(%arg0: i32) -> (i32, i32) {
    %c0_i32 = arith.constant 0 : i32
    %c0_i32_0 = arith.constant 0 : i32
    %c0_i32_1 = arith.constant 0 : i32
    return %c0_i32, %c0_i32_0 : i32, i32
  }
  func.func @transform_3(%arg0: i32) -> (i32, i32) {
    %c0_i32 = arith.constant 0 : i32
    %c0_i32_0 = arith.constant 0 : i32
    %c0_i32_1 = arith.constant 0 : i32
    return %c0_i32, %c0_i32_0 : i32, i32
  }
  func.func @transform_4(%arg0: i32) -> (i32, i32) {
    %c0_i32 = arith.constant 0 : i32
    %c0_i32_0 = arith.constant 0 : i32
    %c0_i32_1 = arith.constant 0 : i32
    return %c0_i32, %c0_i32_0 : i32, i32
  }
  func.func @transform_5(%arg0: i32) -> (i32, i32) {
    %c0_i32 = arith.constant 0 : i32
    %c0_i32_0 = arith.constant 0 : i32
    return %c0_i32, %arg0 : i32, i32
  }
}

</mosaic_0001>

<llo_original>
// kernel: tpu_custom_call.1
$region0: #{tpu_custom_call.1}
  #allocation0 [shape = 'u32[]', space=smem, size = 0x4, offset = 0x4, fixed_abs, tag = 'smem constant byte address 0x4 - core index']
  #allocation1 [shape = 'u32[144,128]{1,0:T(1,128)}', space=vmem, size = 0x12000, scoped, tag = 'internal scratch']
  #allocation2 [shape = 'f32[1,1]{1,0:T(1,128)S(6)}', space=smem, size = 0x200, scoped, tag = 'scoped memory for tpu_custom_call.1']
  %s0 = inlined_call_operand.vmem [shape: f32[200,32], index: 0, kind: input, shape index: {}]
  %s1 = inlined_call_operand.vmem [shape: f32[64,32], index: 1, kind: input, shape index: {}]
  %s2 = inlined_call_operand.vmem [shape: f32[64,1], index: 2, kind: input, shape index: {}]
  %s3 = inlined_call_operand.vmem [shape: f32[64,1], index: 3, kind: input, shape index: {}]
  %s4 = inlined_call_operand.<no memory space> [shape: f32[1,1], index: 4, kind: input, shape index: {}]
  %s5 = inlined_call_operand.hbm [shape: f32[1,200], index: 5, kind: output, shape index: {}]
  %s6 = sld [smem:[#allocation0]]
  $region53: #{tpu_custom_call.1} parent=0
    _
  %s8 = ssub.s32 1, %s6
  %s9 = scalar_select 0, %s8, %s6
  %10 = sst [smem:[#allocation2]] %s4
  $region1: #{tpu_custom_call.1} parent=0
    #allocation3 [shape = 'u8[1024]{0}', space=vmem, size = 0x400, scoped, tag = 'output window, operand 0']
    #allocation4 [shape = 's32[2]{0}', space=sflag, size = 0x8, scoped, tag = 'scoped memory for tpu_custom_call.1']
    %11 = vsyncpa [#allocation4], 0
    %s12 = scalar_lea.sflag [#allocation4], 1
    %13 = vsyncpa %s12, 0
    loop: start=0, step=1, limit=4
    $region2: #{tpu_custom_call.1} parent=1 // loop_pre_header
      _
    $region3: #{tpu_custom_call.1} parent=1 // loop_header
      %s15 = sphi 0, %s19
      %p16 = scmp.ge.s32.totalorder %s15, 4
      %s25 = sphi 0, %s27
      %s28 = sphi 0, %s25
      %s29 = sphi 0, %s28
      %s45 = sphi 0, %s29
      %s49 = sphi 0, %s49
      %s51 = sphi 0, %s49
      %s52 = sphi 0, %s51
      %s66 = sphi 0, %s52
      %s70 = sphi 0, %s70
      %s72 = sphi 0, %s70
      %s73 = sphi 0, %s72
      %s87 = sphi 0, %s73
      %s91 = sphi 0, %s91
      %s93 = sphi 0, %s91
      %s94 = sphi 0, %s93
      %s108 = sphi 0, %s94
      %s112 = sphi 0, %s112
      %s114 = sphi 0, %s112
      %s115 = sphi 0, %s114
      %s129 = sphi 0, %s115
      %s135 = sphi 0, %s137
      %s138 = sphi 0, %s135
      %s139 = sphi 0, %s138
      %s155 = sphi 0, %s139
    $region4: #{tpu_custom_call.1} parent=1 // loop_header_branch
      %18 = sbr.rel (%p16) target = $region8
    $region5: #{tpu_custom_call.1} parent=1 // loop_body
      %s20 = ssub.s32 %s15, 1
      %s21 = ssub.s32 %s15, 2
      %s22 = sadd.s32 %s15, 1
      %s23 = ssub.s32 %s15, %s22
      %p24 = scmp.eq.s32.totalorder %s23, 0
      %s26 = sadd.s32 %s25, 1
      %s27 = scalar_select %p24, %s25, %s26
      %p30 = pneg %p24
      %p31 = scmp.eq.s32.totalorder %s15, 1
      %p32 = por %p30, %p31
      %p33 = scmp.ne.s32.totalorder %s25, %s28
      %p34 = scmp.eq.s32.totalorder %s15, 0
      %p35 = por %p33, %p34
      %p36 = scmp.ne.s32.totalorder %s25, %s28
      %p37 = scmp.eq.s32.totalorder %s20, 1
      %p38 = por %p36, %p37
      %p39 = scmp.ne.s32.totalorder %s28, %s29
      %p40 = scmp.eq.s32.totalorder %s20, 0
      %p41 = por %p39, %p40
      %p42 = scmp.ne.s32.totalorder %s28, %s29
      %p43 = scmp.eq.s32.totalorder %s21, 1
      %p44 = por %p42, %p43
      %p46 = scmp.ne.s32.totalorder %s29, %s45
      %p47 = scmp.eq.s32.totalorder %s21, 0
      %p48 = por %p46, %p47
      %s50 = sadd.s32 %s49, 1
      %p53 = scmp.eq.s32.totalorder %s15, 1
      %p54 = scmp.ne.s32.totalorder %s49, %s51
      %p55 = scmp.eq.s32.totalorder %s15, 0
      %p56 = por %p54, %p55
      %p57 = scmp.ne.s32.totalorder %s49, %s51
      %p58 = scmp.eq.s32.totalorder %s20, 1
      %p59 = por %p57, %p58
      %p60 = scmp.ne.s32.totalorder %s51, %s52
      %p61 = scmp.eq.s32.totalorder %s20, 0
      %p62 = por %p60, %p61
      %p63 = scmp.ne.s32.totalorder %s51, %s52
      %p64 = scmp.eq.s32.totalorder %s21, 1
      %p65 = por %p63, %p64
      %p67 = scmp.ne.s32.totalorder %s52, %s66
      %p68 = scmp.eq.s32.totalorder %s21, 0
      %p69 = por %p67, %p68
      %s71 = sadd.s32 %s70, 1
      %p74 = scmp.eq.s32.totalorder %s15, 1
      %p75 = scmp.ne.s32.totalorder %s70, %s72
      %p76 = scmp.eq.s32.totalorder %s15, 0
      %p77 = por %p75, %p76
      %p78 = scmp.ne.s32.totalorder %s70, %s72
      %p79 = scmp.eq.s32.totalorder %s20, 1
      %p80 = por %p78, %p79
      %p81 = scmp.ne.s32.totalorder %s72, %s73
      %p82 = scmp.eq.s32.totalorder %s20, 0
      %p83 = por %p81, %p82
      %p84 = scmp.ne.s32.totalorder %s72, %s73
      %p85 = scmp.eq.s32.totalorder %s21, 1
      %p86 = por %p84, %p85
      %p88 = scmp.ne.s32.totalorder %s73, %s87
      %p89 = scmp.eq.s32.totalorder %s21, 0
      %p90 = por %p88, %p89
      %s92 = sadd.s32 %s91, 1
      %p95 = scmp.eq.s32.totalorder %s15, 1
      %p96 = scmp.ne.s32.totalorder %s91, %s93
      %p97 = scmp.eq.s32.totalorder %s15, 0
      %p98 = por %p96, %p97
      %p99 = scmp.ne.s32.totalorder %s91, %s93
      %p100 = scmp.eq.s32.totalorder %s20, 1
      %p101 = por %p99, %p100
      %p102 = scmp.ne.s32.totalorder %s93, %s94
      %p103 = scmp.eq.s32.totalorder %s20, 0
      %p104 = por %p102, %p103
      %p105 = scmp.ne.s32.totalorder %s93, %s94
      %p106 = scmp.eq.s32.totalorder %s21, 1
      %p107 = por %p105, %p106
      %p109 = scmp.ne.s32.totalorder %s94, %s108
      %p110 = scmp.eq.s32.totalorder %s21, 0
      %p111 = por %p109, %p110
      %s113 = sadd.s32 %s112, 1
      %p116 = scmp.eq.s32.totalorder %s15, 1
      %p117 = scmp.ne.s32.totalorder %s112, %s114
      %p118 = scmp.eq.s32.totalorder %s15, 0
      %p119 = por %p117, %p118
      %p120 = scmp.ne.s32.totalorder %s112, %s114
      %p121 = scmp.eq.s32.totalorder %s20, 1
      %p122 = por %p120, %p121
      %p123 = scmp.ne.s32.totalorder %s114, %s115
      %p124 = scmp.eq.s32.totalorder %s20, 0
      %p125 = por %p123, %p124
      %p126 = scmp.ne.s32.totalorder %s114, %s115
      %p127 = scmp.eq.s32.totalorder %s21, 1
      %p128 = por %p126, %p127
      %p130 = scmp.ne.s32.totalorder %s115, %s129
      %p131 = scmp.eq.s32.totalorder %s21, 0
      %p132 = por %p130, %p131
      %s133 = ssub.s32 %s15, %s22
      %p134 = scmp.eq.s32.totalorder %s133, 0
      %s136 = sadd.s32 %s135, 1
      %s137 = scalar_select %p134, %s135, %s136
      %p140 = pneg %p134
      %p141 = scmp.eq.s32.totalorder %s15, 1
      %p142 = por %p140, %p141
      %p143 = scmp.ne.s32.totalorder %s135, %s138
      %p144 = scmp.eq.s32.totalorder %s15, 0
      %p145 = por %p143, %p144
      %p146 = scmp.ne.s32.totalorder %s135, %s138
      %p147 = scmp.eq.s32.totalorder %s20, 1
      %p148 = por %p146, %p147
      %p149 = scmp.ne.s32.totalorder %s138, %s139
      %p150 = scmp.eq.s32.totalorder %s20, 0
      %p151 = por %p149, %p150
      %p152 = scmp.ne.s32.totalorder %s138, %s139
      %p153 = scmp.eq.s32.totalorder %s21, 1
      %p154 = por %p152, %p153
      %p156 = scmp.ne.s32.totalorder %s139, %s155
      %p157 = scmp.eq.s32.totalorder %s21, 0
      %p158 = por %p156, %p157
      %p159 = scmp.le.s32.totalorder 1, %s15
      %p160 = scmp.lt.s32.totalorder %s15, 3
      %p161 = pnand %p159, %p160
      %p162 = pneg %p161
      // Predicated region
      $region9: #{tpu_custom_call.1} parent=5 // pred_check
        _
      $region10: #{tpu_custom_call.1} parent=5 // pred_check_branch
        %164 = sbr.rel (%p161) target = $region12
      $region11: #{tpu_custom_call.1} parent=5 // pred_region
        %s165 = ssub.s32 %s15, 1
        // Predicated region
        $region13: #{tpu_custom_call.1} parent=11 // pred_check
          %p166 = pneg %p62
        $region14: #{tpu_custom_call.1} parent=11 // pred_check_branch
          %168 = sbr.rel (%p166) target = $region16
        $region15: #{tpu_custom_call.1} parent=11 // pred_region
          _
        $region16: #{tpu_custom_call.1} parent=11 // pred_fallthru
          _
        // Predicated region
        $region17: #{tpu_custom_call.1} parent=11 // pred_check
          %p169 = pneg %p83
        $region18: #{tpu_custom_call.1} parent=11 // pred_check_branch
          %171 = sbr.rel (%p169) target = $region20
        $region19: #{tpu_custom_call.1} parent=11 // pred_region
          _
        $region20: #{tpu_custom_call.1} parent=11 // pred_fallthru
          _
        // Predicated region
        $region21: #{tpu_custom_call.1} parent=11 // pred_check
          %p172 = pneg %p104
        $region22: #{tpu_custom_call.1} parent=11 // pred_check_branch
          %174 = sbr.rel (%p172) target = $region24
        $region23: #{tpu_custom_call.1} parent=11 // pred_region
          _
        $region24: #{tpu_custom_call.1} parent=11 // pred_fallthru
          _
        // Predicated region
        $region25: #{tpu_custom_call.1} parent=11 // pred_check
          %p175 = pneg %p125
        $region26: #{tpu_custom_call.1} parent=11 // pred_check_branch
          %177 = sbr.rel (%p175) target = $region28
        $region27: #{tpu_custom_call.1} parent=11 // pred_region
          _
        $region28: #{tpu_custom_call.1} parent=11 // pred_fallthru
          _
      $region12: #{tpu_custom_call.1} parent=5 // pred_fallthru
        _
      %p178 = scmp.lt.s32.totalorder %s15, 2
      // Predicated region
      $region29: #{tpu_custom_call.1} parent=5 // pred_check
        %p179 = pneg %p178
      $region30: #{tpu_custom_call.1} parent=5 // pred_check_branch
        %181 = sbr.rel (%p179) target = $region32
      $region31: #{tpu_custom_call.1} parent=5 // pred_region
        // Predicated region
        $region33: #{tpu_custom_call.1} parent=31 // pred_check
          %p182 = pneg %p35
        $region34: #{tpu_custom_call.1} parent=31 // pred_check_branch
          %184 = sbr.rel (%p182) target = $region36
        $region35: #{tpu_custom_call.1} parent=31 // pred_region
          %s185 = smul.u32 16, %s15
          %s186 = ssub.s32 25, %s185
          %p187 = scmp.lt.s32.totalorder %s186, 16
          %s188 = scalar_select %p187, %s186, 16
          %s189 = smul.u32 128, %s188
          %p190 = scmp.lt.s32.totalorder %s185, 24
          %s191 = scalar_select %p190, %s185, 24
          %s192 = smul.addr %s191, 8
          %s193 = scalar_lea.vmem %s0, %s192
          %s194 = smul.u32 16, %s15
          %s195 = ssub.s32 25, %s194
          %p196 = scmp.lt.s32.totalorder %s195, 16
          %s197 = scalar_select %p196, %s195, 16
          %s198 = smul.u32 128, %s197
        $region36: #{tpu_custom_call.1} parent=31 // pred_fallthru
          _
      $region32: #{tpu_custom_call.1} parent=5 // pred_fallthru
        _
      %p199 = scmp.le.s32.totalorder 1, %s15
      %p200 = scmp.lt.s32.totalorder %s15, 3
      %p201 = pnand %p199, %p200
      %p202 = pneg %p201
      // Predicated region
      $region37: #{tpu_custom_call.1} parent=5 // pred_check
        _
      $region38: #{tpu_custom_call.1} parent=5 // pred_check_branch
        %204 = sbr.rel (%p201) target = $region40
      $region39: #{tpu_custom_call.1} parent=5 // pred_region
        %s205 = ssub.s32 %s15, 1
        %s206 = smul.u32 16, %s20
        %s207 = ssub.s32 25, %s206
        %p208 = scmp.lt.s32.totalorder %s207, 16
        %s209 = scalar_select %p208, %s207, 16
        %s210 = smul.u32 128, %s209
        %p211 = scmp.lt.s32.totalorder %s206, 24
        %s212 = scalar_select %p211, %s206, 24
        %s213 = smul.addr %s212, 8
        %s214 = scalar_lea.vmem %s0, %s213
        %p215 = pneg %p41
        %p216 = pneg %p38
        %p217 = pneg %p62
        %p218 = pneg %p59
        %p219 = pneg %p83
        %p220 = pneg %p80
        %p221 = pneg %p104
        %p222 = pneg %p101
        %p223 = pneg %p125
        %p224 = pneg %p122
        %p225 = pneg %p151
        %p226 = pneg %p148
        %s227 = sand.u32 %s138, 1
        %s228 = scalar_lea.sflag [#allocation4], %s227
        %s229 = sand.u32 %s138, 1
        %s230 = scalar_lea.vmem [#allocation3], %s229
        %s231 = smul.u32 16, %s20
        %s232 = ssub.s32 25, %s231
        %p233 = scmp.lt.s32.totalorder %s232, 16
        %s234 = scalar_select %p233, %s232, 16
        %s235 = smul.u32 128, %s234
        %p236 = scmp.lt.s32.totalorder %s231, 24
        %s237 = scalar_select %p236, %s231, 24
        %s238 = smul.addr %s237, 8
        %s239 = scalar_lea.vmem %s0, %s238
        %s240 = smul.u32 16, %s20
        %s241 = ssub.s32 25, %s240
        %p242 = scmp.lt.s32.totalorder %s241, 16
        %s243 = scalar_select %p242, %s241, 16
        %s244 = smul.u32 128, %s243
        %v245 = vld [vmem:[%s1] sm:$0xff]
        %v246 = vld [vmem:[%s1 + $0x8] sm:$0xff]
        %v247 = vld [vmem:[%s1 + $0x10] sm:$0xff]
        %v248 = vld [vmem:[%s1 + $0x18] sm:$0xff]
        %v249 = vld [vmem:[%s1 + $0x20] sm:$0xff]
        %v250 = vld [vmem:[%s1 + $0x28] sm:$0xff]
        %v251 = vld [vmem:[%s1 + $0x30] sm:$0xff]
        %v252 = vld [vmem:[%s1 + $0x38] sm:$0xff]
        %v253 = vld [vmem:[%s239] sm:$0xff]
        %v254 = vld [vmem:[%s239 + $0x8] sm:$0xff]
        %v255 = vld [vmem:[%s239 + $0x10] sm:$0xff]
        %v256 = vld [vmem:[%s239 + $0x18] sm:$0xff]
        %v257 = vld [vmem:[%s239 + $0x20] sm:$0xff]
        %v258 = vld [vmem:[%s239 + $0x28] sm:$0xff]
        %v259 = vld [vmem:[%s239 + $0x30] sm:$0xff]
        %v260 = vld [vmem:[%s239 + $0x38] sm:$0xff]
        %v261 = vld [vmem:[%s239 + $0x40] sm:$0xff]
        %v262 = vld [vmem:[%s239 + $0x48] sm:$0xff]
        %v263 = vld [vmem:[%s239 + $0x50] sm:$0xff]
        %v264 = vld [vmem:[%s239 + $0x58] sm:$0xff]
        %v265 = vld [vmem:[%s239 + $0x60] sm:$0xff]
        %v266 = vld [vmem:[%s239 + $0x68] sm:$0xff]
        %v267 = vld [vmem:[%s239 + $0x70] sm:$0xff]
        %v268 = vld [vmem:[%s239 + $0x78] sm:$0xff]
        %v269 = vld [vmem:[%s2] sm:$0xff]
        %v270 = vld [vmem:[%s2 + $0x8] sm:$0xff]
        %v271 = vld [vmem:[%s2 + $0x10] sm:$0xff]
        %v272 = vld [vmem:[%s2 + $0x18] sm:$0xff]
        %v273 = vld [vmem:[%s2 + $0x20] sm:$0xff]
        %v274 = vld [vmem:[%s2 + $0x28] sm:$0xff]
        %v275 = vld [vmem:[%s2 + $0x30] sm:$0xff]
        %v276 = vld [vmem:[%s2 + $0x38] sm:$0xff]
        %278 = vset.pattern.permute.xlu0 0
        %279 = vperm.xlu0 %278, %v269
        %v280 = vpop.permute.xlu0 %279
        %283 = vset.pattern.permute.xlu0 0
        %284 = vperm.xlu0 %283, %v270
        %v285 = vpop.permute.xlu0 %284
        %288 = vset.pattern.permute.xlu0 0
        %289 = vperm.xlu0 %288, %v271
        %v290 = vpop.permute.xlu0 %289
        %293 = vset.pattern.permute.xlu0 0
        %294 = vperm.xlu0 %293, %v272
        %v295 = vpop.permute.xlu0 %294
        %298 = vset.pattern.permute.xlu0 0
        %299 = vperm.xlu0 %298, %v273
        %v300 = vpop.permute.xlu0 %299
        %303 = vset.pattern.permute.xlu0 0
        %304 = vperm.xlu0 %303, %v274
        %v305 = vpop.permute.xlu0 %304
        %308 = vset.pattern.permute.xlu0 0
        %309 = vperm.xlu0 %308, %v275
        %v310 = vpop.permute.xlu0 %309
        %313 = vset.pattern.permute.xlu0 0
        %314 = vperm.xlu0 %313, %v276
        %v315 = vpop.permute.xlu0 %314
        %vm317 = vcmask 261120
        %v319 = vsel %vm317, %v245, 0
        %v322 = vsel %vm317, %v246, 0
        %v325 = vsel %vm317, %v247, 0
        %v328 = vsel %vm317, %v248, 0
        %v331 = vsel %vm317, %v249, 0
        %v334 = vsel %vm317, %v250, 0
        %v337 = vsel %vm317, %v251, 0
        %v340 = vsel %vm317, %v252, 0
        %v343 = vsel %vm317, %v253, 0
        %v346 = vsel %vm317, %v254, 0
        %v349 = vsel %vm317, %v255, 0
        %v352 = vsel %vm317, %v256, 0
        %v355 = vsel %vm317, %v257, 0
        %v358 = vsel %vm317, %v258, 0
        %v361 = vsel %vm317, %v259, 0
        %v364 = vsel %vm317, %v260, 0
        %v367 = vsel %vm317, %v261, 0
        %v370 = vsel %vm317, %v262, 0
        %v373 = vsel %vm317, %v263, 0
        %v376 = vsel %vm317, %v264, 0
        %v379 = vsel %vm317, %v265, 0
        %v382 = vsel %vm317, %v266, 0
        %v385 = vsel %vm317, %v267, 0
        %v388 = vsel %vm317, %v268, 0
        %390 = vmatprep.subr.mxu0 0.0
        %391 = vmatpush1.xpose.msra.mxu0 %v388
        %392 = vmatprep.subr.mxu0 0.0
        %393 = vmatpush1.xpose.msra.mxu0 %v385
        %394 = vmatprep.subr.mxu0 0.0
        %395 = vmatpush1.xpose.msra.mxu0 %v382
        %396 = vmatprep.subr.mxu0 0.0
        %397 = vmatpush1.xpose.msra.mxu0 %v379
        %398 = vmatprep.subr.mxu0 0.0
        %399 = vmatpush1.xpose.msra.mxu0 %v376
        %400 = vmatprep.subr.mxu0 0.0
        %401 = vmatpush1.xpose.msra.mxu0 %v373
        %402 = vmatprep.subr.mxu0 0.0
        %403 = vmatpush1.xpose.msra.mxu0 %v370
        %404 = vmatprep.subr.mxu0 0.0
        %405 = vmatpush1.xpose.msra.mxu0 %v367
        %406 = vmatprep.subr.mxu0 0.0
        %407 = vmatpush1.xpose.msra.mxu0 %v364
        %408 = vmatprep.subr.mxu0 0.0
        %409 = vmatpush1.xpose.msra.mxu0 %v361
        %410 = vmatprep.subr.mxu0 0.0
        %411 = vmatpush1.xpose.msra.mxu0 %v358
        %412 = vmatprep.subr.mxu0 0.0
        %413 = vmatpush1.xpose.msra.mxu0 %v355
        %414 = vmatprep.subr.mxu0 0.0
        %415 = vmatpush1.xpose.msra.mxu0 %v352
        %416 = vmatprep.subr.mxu0 0.0
        %417 = vmatpush1.xpose.msra.mxu0 %v349
        %418 = vmatprep.subr.mxu0 0.0
        %419 = vmatpush1.xpose.msra.mxu0 %v346
        %420 = vmatprep.subr.mxu0 0.0
        %421 = vmatpush1.xpose.msra.mxu0 %v343
        %422 = vmatprep.subr.mxu0 0.0
        %423 = vmatpush2.xpose.msra.mxu0 0.0
        %424 = vmatprep.subr.mxu0 0.0
        %425 = vmatpush2.xpose.msra.mxu0 0.0
        %426 = vmatprep.subr.mxu0 0.0
        %427 = vmatpush2.xpose.msra.mxu0 0.0
        %428 = vmatprep.subr.mxu0 0.0
        %429 = vmatpush2.xpose.msra.mxu0 0.0
        %430 = vmatprep.subr.mxu0 0.0
        %431 = vmatpush2.xpose.msra.mxu0 0.0
        %432 = vmatprep.subr.mxu0 0.0
        %433 = vmatpush2.xpose.msra.mxu0 0.0
        %434 = vmatprep.subr.mxu0 0.0
        %435 = vmatpush2.xpose.msra.mxu0 0.0
        %436 = vmatprep.subr.mxu0 0.0
        %437 = vmatpush2.xpose.msra.mxu0 0.0
        %438 = vmatprep.subr.mxu0 0.0
        %439 = vmatpush2.xpose.msra.mxu0 0.0
        %440 = vmatprep.subr.mxu0 0.0
        %441 = vmatpush2.xpose.msra.mxu0 0.0
        %442 = vmatprep.subr.mxu0 0.0
        %443 = vmatpush2.xpose.msra.mxu0 0.0
        %444 = vmatprep.subr.mxu0 0.0
        %445 = vmatpush2.xpose.msra.mxu0 0.0
        %446 = vmatprep.subr.mxu0 0.0
        %447 = vmatpush2.xpose.msra.mxu0 0.0
        %448 = vmatprep.subr.mxu0 0.0
        %449 = vmatpush2.xpose.msra.mxu0 0.0
        %450 = vmatprep.subr.mxu0 0.0
        %451 = vmatpush2.xpose.msra.mxu0 0.0
        %452 = vmatprep.subr.mxu0 0.0
        %453 = vmatpush2.xpose.msra.mxu0 0.0
        %454 = vmatprep.mubr.f32.mxu0 0.0
        %455 = vmatmul.mubr.f32.gmra.mxu0 %v319
        %v456 = vpop.f32.mrf.mxu0
        %v457 = vadd.f32 %v280, %v456
        %v458 = vpop.f32.mrf.mxu0
        %459 = vmatprep.mubr.f32.mxu0 0.0
        %460 = vmatmul.mubr.f32.gmra.mxu0 %v322
        %v461 = vpop.f32.mrf.mxu0
        %v462 = vadd.f32 %v285, %v461
        %v463 = vpop.f32.mrf.mxu0
        %464 = vmatprep.mubr.f32.mxu0 0.0
        %465 = vmatmul.mubr.f32.gmra.mxu0 %v325
        %v466 = vpop.f32.mrf.mxu0
        %v467 = vadd.f32 %v290, %v466
        %v468 = vpop.f32.mrf.mxu0
        %469 = vmatprep.mubr.f32.mxu0 0.0
        %470 = vmatmul.mubr.f32.gmra.mxu0 %v328
        %v471 = vpop.f32.mrf.mxu0
        %v472 = vadd.f32 %v295, %v471
        %v473 = vpop.f32.mrf.mxu0
        %474 = vmatprep.mubr.f32.mxu0 0.0
        %475 = vmatmul.mubr.f32.gmra.mxu0 %v331
        %v476 = vpop.f32.mrf.mxu0
        %v477 = vadd.f32 %v300, %v476
        %v478 = vpop.f32.mrf.mxu0
        %479 = vmatprep.mubr.f32.mxu0 0.0
        %480 = vmatmul.mubr.f32.gmra.mxu0 %v334
        %v481 = vpop.f32.mrf.mxu0
        %v482 = vadd.f32 %v305, %v481
        %v483 = vpop.f32.mrf.mxu0
        %484 = vmatprep.mubr.f32.mxu0 0.0
        %485 = vmatmul.mubr.f32.gmra.mxu0 %v337
        %v486 = vpop.f32.mrf.mxu0
        %v487 = vadd.f32 %v310, %v486
        %v488 = vpop.f32.mrf.mxu0
        %489 = vmatprep.mubr.f32.mxu0 0.0
        %490 = vmatmul.mubr.f32.gmra.mxu0 %v340
        %v491 = vpop.f32.mrf.mxu0
        %v492 = vadd.f32 %v315, %v491
        %v493 = vpop.f32.mrf.mxu0
        %494 = vdwg.mxu0
        %v495 = vmax.f32 %v457, 0.0
        %v496 = vmax.f32 %v462, 0.0
        %v497 = vmax.f32 %v467, 0.0
        %v498 = vmax.f32 %v472, 0.0
        %v499 = vmax.f32 %v477, 0.0
        %v500 = vmax.f32 %v482, 0.0
        %v501 = vmax.f32 %v487, 0.0
        %v502 = vmax.f32 %v492, 0.0
        %v503 = vld [vmem:[%s3] sm:$0xff]
        %v504 = vld [vmem:[%s3 + $0x8] sm:$0xff]
        %v505 = vld [vmem:[%s3 + $0x10] sm:$0xff]
        %v506 = vld [vmem:[%s3 + $0x18] sm:$0xff]
        %v507 = vld [vmem:[%s3 + $0x20] sm:$0xff]
        %v508 = vld [vmem:[%s3 + $0x28] sm:$0xff]
        %v509 = vld [vmem:[%s3 + $0x30] sm:$0xff]
        %v510 = vld [vmem:[%s3 + $0x38] sm:$0xff]
        %512 = vset.pattern.permute.xlu0 0
        %513 = vperm.xlu0 %512, %v503
        %v514 = vpop.permute.xlu0 %513
        %517 = vset.pattern.permute.xlu0 0
        %518 = vperm.xlu0 %517, %v504
        %v519 = vpop.permute.xlu0 %518
        %522 = vset.pattern.permute.xlu0 0
        %523 = vperm.xlu0 %522, %v505
        %v524 = vpop.permute.xlu0 %523
        %527 = vset.pattern.permute.xlu0 0
        %528 = vperm.xlu0 %527, %v506
        %v529 = vpop.permute.xlu0 %528
        %532 = vset.pattern.permute.xlu0 0
        %533 = vperm.xlu0 %532, %v507
        %v534 = vpop.permute.xlu0 %533
        %537 = vset.pattern.permute.xlu0 0
        %538 = vperm.xlu0 %537, %v508
        %v539 = vpop.permute.xlu0 %538
        %542 = vset.pattern.permute.xlu0 0
        %543 = vperm.xlu0 %542, %v509
        %v544 = vpop.permute.xlu0 %543
        %547 = vset.pattern.permute.xlu0 0
        %548 = vperm.xlu0 %547, %v510
        %v549 = vpop.permute.xlu0 %548
        %v551 = vmul.f32 %v495, %v514
        %v552 = vmul.f32 %v496, %v519
        %v553 = vmul.f32 %v497, %v524
        %v554 = vmul.f32 %v498, %v529
        %v555 = vmul.f32 %v499, %v534
        %v556 = vmul.f32 %v500, %v539
        %v557 = vmul.f32 %v501, %v544
        %v558 = vmul.f32 %v502, %v549
        %v559 = vadd.f32 %v551, %v552
        %v560 = vadd.f32 %v559, %v553
        %v561 = vadd.f32 %v560, %v554
        %v562 = vadd.f32 %v561, %v555
        %v563 = vadd.f32 %v562, %v556
        %v564 = vadd.f32 %v563, %v557
        %v565 = vadd.f32 %v564, %v558
        %v566 = vrot.slane %v565, 4
        %v567 = vadd.f32 %v565, %v566
        %v568 = vrot.slane %v567, 2
        %v569 = vadd.f32 %v567, %v568
        %v570 = vrot.slane %v569, 1
        %v571 = vadd.f32 %v569, %v570
        %s572 = sld [smem:[#allocation2]]
        %v573 = vstv %s572
        %v574 = vadd.f32 %v571, %v573
        %v575 = vsub.f32 0.0, %v574
        %v576 = vmul.f32 %v575, 1.442695
        %v577 = vpow.pop %v576
        %v578 = vadd.f32 %v577, 1.0
        %v579 = vrcp.pop %v578
        %v580 = vmul.f32 1.0, %v579
        %581 = vst [vmem:[%s230] sm:$0x1] %v580
        %s582 = sand.u32 %s138, 1
        %s583 = scalar_lea.sflag [#allocation4], %s582
        %s584 = sand.u32 %s138, 1
        %s585 = scalar_lea.vmem [#allocation3], %s584
        // Predicated region
        $region41: #{tpu_custom_call.1} parent=39 // pred_check
          %p586 = pneg %p148
        $region42: #{tpu_custom_call.1} parent=39 // pred_check_branch
          %588 = sbr.rel (%p586) target = $region44
        $region43: #{tpu_custom_call.1} parent=39 // pred_region
          %s590 = ssub.s32 16, 16
          %591 = vsyncadd %s583, %s590
          %s592 = smul.addr %s20, 16
          %s593 = scalar_lea.hbm %s5, %s592
          %s595 = sshll.u32 %s585, 4
          %s596 = int_to_ptr.vmem [resolvable:$true] %s595
          %598 = dma.vmem_to_hbm [thread:$0]  %s596, 16, %s593, %s583
        $region44: #{tpu_custom_call.1} parent=39 // pred_fallthru
          _
      $region40: #{tpu_custom_call.1} parent=5 // pred_fallthru
        _
      %p599 = scmp.le.s32.totalorder 2, %s15
      // Predicated region
      $region45: #{tpu_custom_call.1} parent=5 // pred_check
        %p600 = pneg %p599
      $region46: #{tpu_custom_call.1} parent=5 // pred_check_branch
        %602 = sbr.rel (%p600) target = $region48
      $region47: #{tpu_custom_call.1} parent=5 // pred_region
        %s603 = ssub.s32 %s15, 2
        // Predicated region
        $region49: #{tpu_custom_call.1} parent=47 // pred_check
          %p604 = pneg %p154
        $region50: #{tpu_custom_call.1} parent=47 // pred_check_branch
          %606 = sbr.rel (%p604) target = $region52
        $region51: #{tpu_custom_call.1} parent=47 // pred_region
          %s607 = sand.u32 %s139, 1
          %s608 = scalar_lea.sflag [#allocation4], %s607
          %s609 = sand.u32 %s139, 1
          %s610 = scalar_lea.vmem [#allocation3], %s609
          %611 = dma.done %s608, 16
        $region52: #{tpu_custom_call.1} parent=47 // pred_fallthru
          _
      $region48: #{tpu_custom_call.1} parent=5 // pred_fallthru
        _
    $region6: #{tpu_custom_call.1} parent=1 // loop_footer
      %s19 = sadd.s32 1, %s15
    $region7: #{tpu_custom_call.1} parent=1 // loop_footer_branch
      %14 = sbr.rel target = $region3
    $region8: #{tpu_custom_call.1} parent=1 // loop_exit
      _
    %612 = vsyncpa [#allocation4], 1
    %s613 = scalar_lea.sflag [#allocation4], 1
    %614 = vsyncpa %s613, 1

</llo_original>
